<compile_context>
chip_gen: v7x
topology: tpu7x:2x2x1
jax: 0.10.0
libtpu: 0.0.40
codegen_flags: <defaults>
</compile_context>

<pallas_src>
import functools
import math

import jax
import jax.numpy as jnp
from jax.experimental import pallas as pl
from jax.experimental.pallas import tpu as pltpu


def _kde_kernel(y_ref, xx_ref, xt_ref, o_ref, ys_sc, m_sc, s_sc, *, inv_bw2, Z):
    """One (tq query-block, tn data-block) step of the online logsumexp."""
    j = pl.program_id(1)

    @pl.when(j == 0)
    def _():
        # The y block is resident across the whole j loop: scale it once.
        ys_sc[...] = y_ref[...] * inv_bw2                       # (tq, m)
        m_sc[...] = jnp.full_like(m_sc, -jnp.inf)
        s_sc[...] = jnp.zeros_like(s_sc)

    # Partial log-kernel with the ||y||^2 term hoisted out of the j-loop:
    #   g[i, j] = inv_bw2 * (y_i . x_j) - 0.5 * inv_bw2 * ||x_j||^2
    # x_t is (m, tn): lane-dense, native (K, N) MXU feed.
    xy = jnp.dot(ys_sc[...], xt_ref[...],
                 preferred_element_type=jnp.float32)            # (tq, tn) via MXU
    g = xy + xx_ref[...]        # xx is (1, tn); -inf on padded columns -> exp() = 0

    # Online logsumexp over the n (training-point) axis.
    m_new = jnp.maximum(m_sc[...], jnp.max(g, axis=-1, keepdims=True))
    s_sc[...] = jnp.exp(m_sc[...] - m_new) * s_sc[...] + jnp.sum(
        jnp.exp(g - m_new), axis=-1, keepdims=True)
    m_sc[...] = m_new

    @pl.when(j == pl.num_programs(1) - 1)
    def _():
        y = y_ref[...]
        yy = jnp.sum(y * y, axis=-1, keepdims=True)             # (tq, 1), once per q tile
        res = m_sc[...] + jnp.log(s_sc[...]) - 0.5 * inv_bw2 * yy - Z   # (tq, 1)
        # Lane-dense store: one (tq,1)->(1,tq) relayout per q tile (negligible).
        o_ref[0] = jnp.transpose(res)


def _round_up(a, b):
    return (a + b - 1) // b * b


def _num_tensorcores():
    """Best-effort TensorCore count (v5e/v6e: 1, v7x: 2); default to 1."""
    try:
        return max(1, int(getattr(jax.devices()[0], "num_cores", 1) or 1))
    except Exception:
        return 1


def _pick_query_tile(q, num_cores):
    """Query tile: fill the MXU (<=256 rows); >=2 blocks only on multi-TC chips."""
    q8 = _round_up(q, 8)
    if num_cores >= 2 and q8 > 8:
        # Split the parallel q axis so both TensorCores get work (v7x megacore).
        return min(256, _round_up((q8 + 1) // 2, 8))
    # Single-core chips (v5e/v6e): no reason to shrink tq below the MXU row count.
    return min(256, q8)


def _pick_data_tile(n):
    """Data tile along n (lane axis of x_t / xx): multiple of 128, up to 2048."""
    return min(2048, _round_up(n, 128))


def kde_forward(y, x, bandwidth, *, tq=None, tn=None):
    """Gaussian-kernel KDE log-density of queries y under data x."""
    y = jnp.asarray(y, jnp.float32)
    x = jnp.asarray(x, jnp.float32)
    q, m = y.shape
    n, m2 = x.shape
    assert m == m2

    num_cores = _num_tensorcores()
    if tq is None:
        tq = _pick_query_tile(q, num_cores)
    else:
        tq = _round_up(min(int(tq), _round_up(q, 8)), 8)
    if tn is None:
        tn = _pick_data_tile(n)
    else:
        tn = _round_up(min(int(tn), _round_up(n, 128)), 128)

    q_pad = _round_up(q, tq)
    n_pad = _round_up(n, tn)
    nq, nj = q_pad // tq, n_pad // tn

    # Constants (match the PyTorch formula exactly; Z uses the *real* n).
    Z = 0.5 * m * math.log(2.0 * math.pi) + m * math.log(float(bandwidth)) + math.log(float(n))
    inv_bw2 = 1.0 / (float(bandwidth) * float(bandwidth))

    # Padded, lane-dense operands.
    y_p = jnp.zeros((q_pad, m), jnp.float32).at[:q].set(y)
    x_t = jnp.zeros((m, n_pad), jnp.float32).at[:, :n].set(x.T)
    # Per-training-point norm, pre-scaled; -inf on padded columns masks them out.
    xx = (-0.5 * inv_bw2) * jnp.sum(x * x, axis=-1, dtype=jnp.float32)          # (n,)
    xx_p = jnp.full((1, n_pad), -jnp.inf, dtype=jnp.float32).at[0, :n].set(xx)  # (1, n_pad)

    kernel = functools.partial(_kde_kernel, inv_bw2=inv_bw2, Z=Z)

    out = pl.pallas_call(
        kernel,
        out_shape=jax.ShapeDtypeStruct((nq, 1, tq), jnp.float32),
        grid_spec=pltpu.PrefetchScalarGridSpec(
            num_scalar_prefetch=0,
            grid=(nq, nj),
            in_specs=[
                pl.BlockSpec((tq, m), lambda i, j: (i, 0)),     # queries (resident over j)
                pl.BlockSpec((1, tn), lambda i, j: (0, j)),     # -0.5*inv_bw2*||x||^2
                pl.BlockSpec((m, tn), lambda i, j: (0, j)),     # training data, transposed
            ],
            out_specs=pl.BlockSpec((1, 1, tq), lambda i, j: (i, 0, 0)),
            scratch_shapes=[
                pltpu.VMEM((tq, m), jnp.float32),   # y * inv_bw2 (hoisted out of j loop)
                pltpu.VMEM((tq, 1), jnp.float32),   # running max
                pltpu.VMEM((tq, 1), jnp.float32),   # running sum
            ],
        ),
        compiler_params=pltpu.CompilerParams(
            dimension_semantics=("parallel", "arbitrary")),
    )(y_p, xx_p, x_t)
    return out.reshape(q_pad)[:q]


def kde_reference(y, x, bandwidth):
    """Pure-JAX reference matching the PyTorch module."""
    q, m = y.shape
    n, _ = x.shape
    residual = y[:, None, :] - x[None, :, :]
    Z = 0.5 * m * jnp.log(2.0 * jnp.pi) + m * jnp.log(bandwidth) + jnp.log(float(n))
    log_kernel = -0.5 * jnp.sum((residual / bandwidth) ** 2, axis=-1)
    return jax.scipy.special.logsumexp(log_kernel - Z, axis=-1)


if __name__ == "__main__":
    key = jax.random.PRNGKey(0)
    ky, kx = jax.random.split(key)

    q, n, m = 128, 256, 16
    bandwidth = 0.5

    # "training" data held by the estimator (deterministic init, no checkpoint)
    x = jax.random.normal(kx, (n, m), dtype=jnp.float32)
    # query points
    y = jax.random.normal(ky, (q, m), dtype=jnp.float32)

    out = kde_forward(y, x, bandwidth)
    out = jax.block_until_ready(out)

    ref = kde_reference(y, x, bandwidth)
    assert out.shape == (q,)
    assert jnp.allclose(out, ref, atol=1e-3, rtol=1e-3), (
        f"max abs err {jnp.max(jnp.abs(out - ref))}")

    print("KERNEL_OK")
</pallas_src>

<mosaic_0001>
module attributes {stable_mosaic.version = 11 : i64} {
  func.func @_kde_kernel(%arg0: i32, %arg1: i32, %arg2: memref<128x16xf32, #tpu.memory_space<vmem>>, %arg3: memref<1x256xf32, #tpu.memory_space<vmem>>, %arg4: memref<16x256xf32, #tpu.memory_space<vmem>>, %arg5: memref<1x1x128xf32, #tpu.memory_space<vmem>>, %arg6: memref<128x16xf32, #tpu.memory_space<vmem>>, %arg7: memref<128x1xf32, #tpu.memory_space<vmem>>, %arg8: memref<128x1xf32, #tpu.memory_space<vmem>>) attributes {dimension_semantics = [#tpu.dimension_semantics<parallel>, #tpu.dimension_semantics<arbitrary>], iteration_bounds = array<i64: 1, 1>, scalar_prefetch = 0 : i64, scratch_operands = 3 : i64, tpu.core_type = #tpu.core_type<tc>, window_params = [{transform_indices = @transform_0, window_bounds = array<i64: 128, 16>}, {transform_indices = @transform_1, window_bounds = array<i64: 1, 256>}, {transform_indices = @transform_2, window_bounds = array<i64: 16, 256>}, {transform_indices = @transform_3, window_bounds = array<i64: 1, 1, 128>}]} {
    %c0_i32 = arith.constant 0 : i32
    %0 = arith.cmpi eq, %arg1, %c0_i32 : i32
    %1 = arith.extui %0 : i1 to i32
    %c0_i32_0 = arith.constant 0 : i32
    %2 = arith.cmpi ne, %1, %c0_i32_0 : i32
    scf.if %2 {
      %c0_20 = arith.constant 0 : index
      %c0_21 = arith.constant 0 : index
      %29 = vector.load %arg2[%c0_20, %c0_21] : memref<128x16xf32, #tpu.memory_space<vmem>>, vector<128x16xf32>
      %cst_22 = arith.constant 4.000000e+00 : f32
      %30 = vector.broadcast %cst_22 : f32 to vector<128x16xf32>
      %31 = arith.mulf %29, %30 : vector<128x16xf32>
      %c0_23 = arith.constant 0 : index
      %c0_24 = arith.constant 0 : index
      %32 = vector.load %arg6[%c0_23, %c0_24] : memref<128x16xf32, #tpu.memory_space<vmem>>, vector<128x16xf32>
      tpu.vector_store %arg6[%c0_23, %c0_24], %31 {strides = array<i32>} : memref<128x16xf32, #tpu.memory_space<vmem>>, vector<128x16xf32>,
      %cst_25 = arith.constant 0xFF800000 : f32
      %33 = vector.broadcast %cst_25 : f32 to vector<128x1xf32>
      %c0_26 = arith.constant 0 : index
      %c0_27 = arith.constant 0 : index
      %34 = vector.load %arg7[%c0_26, %c0_27] : memref<128x1xf32, #tpu.memory_space<vmem>>, vector<128x1xf32>
      tpu.vector_store %arg7[%c0_26, %c0_27], %33 {strides = array<i32>} : memref<128x1xf32, #tpu.memory_space<vmem>>, vector<128x1xf32>,
      %cst_28 = arith.constant 0.000000e+00 : f32
      %35 = vector.broadcast %cst_28 : f32 to vector<128x1xf32>
      %c0_29 = arith.constant 0 : index
      %c0_30 = arith.constant 0 : index
      %36 = vector.load %arg8[%c0_29, %c0_30] : memref<128x1xf32, #tpu.memory_space<vmem>>, vector<128x1xf32>
      tpu.vector_store %arg8[%c0_29, %c0_30], %35 {strides = array<i32>} : memref<128x1xf32, #tpu.memory_space<vmem>>, vector<128x1xf32>,
    } else {
    }
    %c0 = arith.constant 0 : index
    %c0_1 = arith.constant 0 : index
    %3 = vector.load %arg6[%c0, %c0_1] : memref<128x16xf32, #tpu.memory_space<vmem>>, vector<128x16xf32>
    %c0_2 = arith.constant 0 : index
    %c0_3 = arith.constant 0 : index
    %4 = vector.load %arg4[%c0_2, %c0_3] : memref<16x256xf32, #tpu.memory_space<vmem>>, vector<16x256xf32>
    %cst = arith.constant dense<0.000000e+00> : vector<128x256xf32>
    %5 = tpu.matmul %3, %4, %cst {dimension_numbers = #tpu.dot_dimension_numbers<[1], [0], [0], [1], [0, 0, 1, 1], [], []>} : vector<128x16xf32>, vector<16x256xf32>, vector<128x256xf32> -> vector<128x256xf32>
    %c0_4 = arith.constant 0 : index
    %c0_5 = arith.constant 0 : index
    %6 = vector.load %arg3[%c0_4, %c0_5] : memref<1x256xf32, #tpu.memory_space<vmem>>, vector<1x256xf32>
    %7 = vector.broadcast %6 : vector<1x256xf32> to vector<128x256xf32>
    %8 = arith.addf %5, %7 : vector<128x256xf32>
    %c0_6 = arith.constant 0 : index
    %c0_7 = arith.constant 0 : index
    %9 = vector.load %arg7[%c0_6, %c0_7] : memref<128x1xf32, #tpu.memory_space<vmem>>, vector<128x1xf32>
    %cst_8 = arith.constant dense<0xFF800000> : vector<128xf32>
    %10 = vector.multi_reduction <maximumf>, %8, %cst_8 [1] : vector<128x256xf32> to vector<128xf32>
    %11 = vector.shape_cast %10 : vector<128xf32> to vector<128x1xf32>
    %12 = arith.maximumf %9, %11 : vector<128x1xf32>
    %c0_9 = arith.constant 0 : index
    %c0_10 = arith.constant 0 : index
    %13 = vector.load %arg7[%c0_9, %c0_10] : memref<128x1xf32, #tpu.memory_space<vmem>>, vector<128x1xf32>
    %14 = arith.subf %13, %12 : vector<128x1xf32>
    %15 = math.exp %14 : vector<128x1xf32>
    %c0_11 = arith.constant 0 : index
    %c0_12 = arith.constant 0 : index
    %16 = vector.load %arg8[%c0_11, %c0_12] : memref<128x1xf32, #tpu.memory_space<vmem>>, vector<128x1xf32>
    %17 = arith.mulf %15, %16 : vector<128x1xf32>
    %18 = vector.broadcast %12 : vector<128x1xf32> to vector<128x256xf32>
    %19 = arith.subf %8, %18 : vector<128x256xf32>
    %20 = math.exp %19 : vector<128x256xf32>
    %cst_13 = arith.constant dense<0.000000e+00> : vector<128xf32>
    %21 = vector.multi_reduction <add>, %20, %cst_13 [1] : vector<128x256xf32> to vector<128xf32>
    %22 = vector.shape_cast %21 : vector<128xf32> to vector<128x1xf32>
    %23 = arith.addf %17, %22 : vector<128x1xf32>
    %c0_14 = arith.constant 0 : index
    %c0_15 = arith.constant 0 : index
    %24 = vector.load %arg8[%c0_14, %c0_15] : memref<128x1xf32, #tpu.memory_space<vmem>>, vector<128x1xf32>
    tpu.vector_store %arg8[%c0_14, %c0_15], %23 {strides = array<i32>} : memref<128x1xf32, #tpu.memory_space<vmem>>, vector<128x1xf32>,
    %c0_16 = arith.constant 0 : index
    %c0_17 = arith.constant 0 : index
    %25 = vector.load %arg7[%c0_16, %c0_17] : memref<128x1xf32, #tpu.memory_space<vmem>>, vector<128x1xf32>
    tpu.vector_store %arg7[%c0_16, %c0_17], %12 {strides = array<i32>} : memref<128x1xf32, #tpu.memory_space<vmem>>, vector<128x1xf32>,
    %c0_i32_18 = arith.constant 0 : i32
    %26 = arith.cmpi eq, %arg1, %c0_i32_18 : i32
    %27 = arith.extui %26 : i1 to i32
    %c0_i32_19 = arith.constant 0 : i32
    %28 = arith.cmpi ne, %27, %c0_i32_19 : i32
    scf.if %28 {
      %c0_20 = arith.constant 0 : index
      %c0_21 = arith.constant 0 : index
      %29 = vector.load %arg2[%c0_20, %c0_21] : memref<128x16xf32, #tpu.memory_space<vmem>>, vector<128x16xf32>
      %30 = arith.mulf %29, %29 : vector<128x16xf32>
      %cst_22 = arith.constant dense<0.000000e+00> : vector<128xf32>
      %31 = vector.multi_reduction <add>, %30, %cst_22 [1] : vector<128x16xf32> to vector<128xf32>
      %32 = vector.shape_cast %31 : vector<128xf32> to vector<128x1xf32>
      %c0_23 = arith.constant 0 : index
      %c0_24 = arith.constant 0 : index
      %33 = vector.load %arg7[%c0_23, %c0_24] : memref<128x1xf32, #tpu.memory_space<vmem>>, vector<128x1xf32>
      %c0_25 = arith.constant 0 : index
      %c0_26 = arith.constant 0 : index
      %34 = vector.load %arg8[%c0_25, %c0_26] : memref<128x1xf32, #tpu.memory_space<vmem>>, vector<128x1xf32>
      %35 = math.log %34 : vector<128x1xf32>
      %36 = arith.addf %33, %35 : vector<128x1xf32>
      %cst_27 = arith.constant 2.000000e+00 : f32
      %37 = vector.broadcast %cst_27 : f32 to vector<128x1xf32>
      %38 = arith.mulf %37, %32 : vector<128x1xf32>
      %39 = arith.subf %36, %38 : vector<128x1xf32>
      %cst_28 = arith.constant 9.15783882 : f32
      %40 = vector.broadcast %cst_28 : f32 to vector<128x1xf32>
      %41 = arith.subf %39, %40 : vector<128x1xf32>
      %42 = tpu.transpose %41, [1, 0] : vector<128x1xf32> -> vector<1x128xf32>
      %c0_29 = arith.constant 0 : index
      %c0_30 = arith.constant 0 : index
      %c0_31 = arith.constant 0 : index
      %43 = vector.load %arg5[%c0_29, %c0_30, %c0_31] : memref<1x1x128xf32, #tpu.memory_space<vmem>>, vector<1x1x128xf32>
      %44 = vector.shape_cast %43 : vector<1x1x128xf32> to vector<1x128xf32>
      %45 = vector.shape_cast %42 : vector<1x128xf32> to vector<1x1x128xf32>
      tpu.vector_store %arg5[%c0_29, %c0_30, %c0_31], %45 {strides = array<i32>} : memref<1x1x128xf32, #tpu.memory_space<vmem>>, vector<1x1x128xf32>,
    } else {
    }
    return
  }
  func.func @transform_0(%arg0: i32, %arg1: i32) -> (i32, i32) {
    %c0_i32 = arith.constant 0 : i32
    %c0_i32_0 = arith.constant 0 : i32
    return %arg0, %c0_i32 : i32, i32
  }
  func.func @transform_1(%arg0: i32, %arg1: i32) -> (i32, i32) {
    %c0_i32 = arith.constant 0 : i32
    %c0_i32_0 = arith.constant 0 : i32
    return %c0_i32, %arg1 : i32, i32
  }
  func.func @transform_2(%arg0: i32, %arg1: i32) -> (i32, i32) {
    %c0_i32 = arith.constant 0 : i32
    %c0_i32_0 = arith.constant 0 : i32
    return %c0_i32, %arg1 : i32, i32
  }
  func.func @transform_3(%arg0: i32, %arg1: i32) -> (i32, i32, i32) {
    %c0_i32 = arith.constant 0 : i32
    %c0_i32_0 = arith.constant 0 : i32
    %c0_i32_1 = arith.constant 0 : i32
    return %arg0, %c0_i32, %c0_i32_0 : i32, i32, i32
  }
}

</mosaic_0001>

<llo_original>
// kernel: tpu_custom_call.1
$region0: #{tpu_custom_call.1}
  #allocation0 [shape = 'u32[]', space=smem, size = 0x4, offset = 0x4, fixed_abs, tag = 'smem constant byte address 0x4 - core index']
  #allocation1 [shape = 'u32[144,128]{1,0:T(1,128)}', space=vmem, size = 0x12000, scoped, tag = 'internal scratch']
  #allocation2 [shape = 'f32[128,16]{1,0:T(8,128)}', space=vmem, size = 0x10000, scoped, tag = 'scratch operand']
  #allocation3 [shape = 'f32[128,1]{1,0:T(8,128)}', space=vmem, size = 0x10000, scoped, tag = 'scratch operand']
  #allocation4 [shape = 'f32[128,1]{1,0:T(8,128)}', space=vmem, size = 0x10000, scoped, tag = 'scratch operand']
  %s0 = inlined_call_operand.vmem [shape: f32[128,16], index: 0, kind: input, shape index: {}]
  %s1 = inlined_call_operand.vmem [shape: f32[1,256], index: 1, kind: input, shape index: {}]
  %s2 = inlined_call_operand.vmem [shape: f32[16,256], index: 2, kind: input, shape index: {}]
  %s3 = inlined_call_operand.hbm [shape: f32[1,1,128], index: 3, kind: output, shape index: {}]
  %s4 = sld [smem:[#allocation0]]
  $region30: #{tpu_custom_call.1} parent=0
    _
  %s6 = ssub.s32 1, %s4
  %s7 = scalar_select 0, %s6, %s4
  $region1: #{tpu_custom_call.1} parent=0
    #allocation5 [shape = 'u8[512]{0}', space=vmem, size = 0x400, scoped, tag = 'output window, operand 0, single buffered']
    #allocation6 [shape = 's32[1]{0}', space=sflag, size = 0x4, scoped, tag = 'scoped memory for tpu_custom_call.1']
    %8 = vsyncpa [#allocation6], 0
    // Predicated region
    $region2: #{tpu_custom_call.1} parent=1 // pred_check
      _
    $region3: #{tpu_custom_call.1} parent=1 // pred_check_branch
      %10 = sbr.rel (0) target = $region5
    $region4: #{tpu_custom_call.1} parent=1 // pred_region
      _
    $region5: #{tpu_custom_call.1} parent=1 // pred_fallthru
      _
    // Predicated region
    $region6: #{tpu_custom_call.1} parent=1 // pred_check
      _
    $region7: #{tpu_custom_call.1} parent=1 // pred_check_branch
      %12 = sbr.rel (0) target = $region9
    $region8: #{tpu_custom_call.1} parent=1 // pred_region
      _
    $region9: #{tpu_custom_call.1} parent=1 // pred_fallthru
      _
    // Predicated region
    $region10: #{tpu_custom_call.1} parent=1 // pred_check
      _
    $region11: #{tpu_custom_call.1} parent=1 // pred_check_branch
      %14 = sbr.rel (0) target = $region13
    $region12: #{tpu_custom_call.1} parent=1 // pred_region
      _
    $region13: #{tpu_custom_call.1} parent=1 // pred_fallthru
      _
    %p15 = scmp.eq.s32.totalorder 0, 0
    // Predicated region
    $region14: #{tpu_custom_call.1} parent=1 // pred_check
      %p16 = pneg %p15
    $region15: #{tpu_custom_call.1} parent=1 // pred_check_branch
      %18 = sbr.rel (%p16) target = $region17
    $region16: #{tpu_custom_call.1} parent=1 // pred_region
      %v19 = vld [vmem:[%s0] sm:$0xff]
      %v20 = vld [vmem:[%s0 + $0x8] sm:$0xff]
      %v21 = vld [vmem:[%s0 + $0x10] sm:$0xff]
      %v22 = vld [vmem:[%s0 + $0x18] sm:$0xff]
      %v23 = vld [vmem:[%s0 + $0x20] sm:$0xff]
      %v24 = vld [vmem:[%s0 + $0x28] sm:$0xff]
      %v25 = vld [vmem:[%s0 + $0x30] sm:$0xff]
      %v26 = vld [vmem:[%s0 + $0x38] sm:$0xff]
      %v27 = vld [vmem:[%s0 + $0x40] sm:$0xff]
      %v28 = vld [vmem:[%s0 + $0x48] sm:$0xff]
      %v29 = vld [vmem:[%s0 + $0x50] sm:$0xff]
      %v30 = vld [vmem:[%s0 + $0x58] sm:$0xff]
      %v31 = vld [vmem:[%s0 + $0x60] sm:$0xff]
      %v32 = vld [vmem:[%s0 + $0x68] sm:$0xff]
      %v33 = vld [vmem:[%s0 + $0x70] sm:$0xff]
      %v34 = vld [vmem:[%s0 + $0x78] sm:$0xff]
      %v35 = vmul.f32 %v19, 4.0
      %v36 = vmul.f32 %v20, 4.0
      %v37 = vmul.f32 %v21, 4.0
      %v38 = vmul.f32 %v22, 4.0
      %v39 = vmul.f32 %v23, 4.0
      %v40 = vmul.f32 %v24, 4.0
      %v41 = vmul.f32 %v25, 4.0
      %v42 = vmul.f32 %v26, 4.0
      %v43 = vmul.f32 %v27, 4.0
      %v44 = vmul.f32 %v28, 4.0
      %v45 = vmul.f32 %v29, 4.0
      %v46 = vmul.f32 %v30, 4.0
      %v47 = vmul.f32 %v31, 4.0
      %v48 = vmul.f32 %v32, 4.0
      %v49 = vmul.f32 %v33, 4.0
      %v50 = vmul.f32 %v34, 4.0
      %vm51 = vcmask 130048
      %52 = vst.msk [vmem:[#allocation2] sm:$0xff] %vm51, %v35
      %53 = vst.msk [vmem:[#allocation2 + $0x8] sm:$0xff] %vm51, %v36
      %54 = vst.msk [vmem:[#allocation2 + $0x10] sm:$0xff] %vm51, %v37
      %55 = vst.msk [vmem:[#allocation2 + $0x18] sm:$0xff] %vm51, %v38
      %56 = vst.msk [vmem:[#allocation2 + $0x20] sm:$0xff] %vm51, %v39
      %57 = vst.msk [vmem:[#allocation2 + $0x28] sm:$0xff] %vm51, %v40
      %58 = vst.msk [vmem:[#allocation2 + $0x30] sm:$0xff] %vm51, %v41
      %59 = vst.msk [vmem:[#allocation2 + $0x38] sm:$0xff] %vm51, %v42
      %60 = vst.msk [vmem:[#allocation2 + $0x40] sm:$0xff] %vm51, %v43
      %61 = vst.msk [vmem:[#allocation2 + $0x48] sm:$0xff] %vm51, %v44
      %62 = vst.msk [vmem:[#allocation2 + $0x50] sm:$0xff] %vm51, %v45
      %63 = vst.msk [vmem:[#allocation2 + $0x58] sm:$0xff] %vm51, %v46
      %64 = vst.msk [vmem:[#allocation2 + $0x60] sm:$0xff] %vm51, %v47
      %65 = vst.msk [vmem:[#allocation2 + $0x68] sm:$0xff] %vm51, %v48
      %66 = vst.msk [vmem:[#allocation2 + $0x70] sm:$0xff] %vm51, %v49
      %67 = vst.msk [vmem:[#allocation2 + $0x78] sm:$0xff] %vm51, %v50
      %vm68 = vcmask 7168
      %69 = vst.msk [vmem:[#allocation3] sm:$0xff] %vm68, -inf
      %70 = vst.msk [vmem:[#allocation3 + $0x8] sm:$0xff] %vm68, -inf
      %71 = vst.msk [vmem:[#allocation3 + $0x10] sm:$0xff] %vm68, -inf
      %72 = vst.msk [vmem:[#allocation3 + $0x18] sm:$0xff] %vm68, -inf
      %73 = vst.msk [vmem:[#allocation3 + $0x20] sm:$0xff] %vm68, -inf
      %74 = vst.msk [vmem:[#allocation3 + $0x28] sm:$0xff] %vm68, -inf
      %75 = vst.msk [vmem:[#allocation3 + $0x30] sm:$0xff] %vm68, -inf
      %76 = vst.msk [vmem:[#allocation3 + $0x38] sm:$0xff] %vm68, -inf
      %77 = vst.msk [vmem:[#allocation3 + $0x40] sm:$0xff] %vm68, -inf
      %78 = vst.msk [vmem:[#allocation3 + $0x48] sm:$0xff] %vm68, -inf
      %79 = vst.msk [vmem:[#allocation3 + $0x50] sm:$0xff] %vm68, -inf
      %80 = vst.msk [vmem:[#allocation3 + $0x58] sm:$0xff] %vm68, -inf
      %81 = vst.msk [vmem:[#allocation3 + $0x60] sm:$0xff] %vm68, -inf
      %82 = vst.msk [vmem:[#allocation3 + $0x68] sm:$0xff] %vm68, -inf
      %83 = vst.msk [vmem:[#allocation3 + $0x70] sm:$0xff] %vm68, -inf
      %84 = vst.msk [vmem:[#allocation3 + $0x78] sm:$0xff] %vm68, -inf
      %85 = vst.msk [vmem:[#allocation4] sm:$0xff] %vm68, 0.0
      %86 = vst.msk [vmem:[#allocation4 + $0x8] sm:$0xff] %vm68, 0.0
      %87 = vst.msk [vmem:[#allocation4 + $0x10] sm:$0xff] %vm68, 0.0
      %88 = vst.msk [vmem:[#allocation4 + $0x18] sm:$0xff] %vm68, 0.0
      %89 = vst.msk [vmem:[#allocation4 + $0x20] sm:$0xff] %vm68, 0.0
      %90 = vst.msk [vmem:[#allocation4 + $0x28] sm:$0xff] %vm68, 0.0
      %91 = vst.msk [vmem:[#allocation4 + $0x30] sm:$0xff] %vm68, 0.0
      %92 = vst.msk [vmem:[#allocation4 + $0x38] sm:$0xff] %vm68, 0.0
      %93 = vst.msk [vmem:[#allocation4 + $0x40] sm:$0xff] %vm68, 0.0
      %94 = vst.msk [vmem:[#allocation4 + $0x48] sm:$0xff] %vm68, 0.0
      %95 = vst.msk [vmem:[#allocation4 + $0x50] sm:$0xff] %vm68, 0.0
      %96 = vst.msk [vmem:[#allocation4 + $0x58] sm:$0xff] %vm68, 0.0
      %97 = vst.msk [vmem:[#allocation4 + $0x60] sm:$0xff] %vm68, 0.0
      %98 = vst.msk [vmem:[#allocation4 + $0x68] sm:$0xff] %vm68, 0.0
      %99 = vst.msk [vmem:[#allocation4 + $0x70] sm:$0xff] %vm68, 0.0
      %100 = vst.msk [vmem:[#allocation4 + $0x78] sm:$0xff] %vm68, 0.0
    $region17: #{tpu_custom_call.1} parent=1 // pred_fallthru
      _
    %v101 = vld [vmem:[#allocation2] sm:$0xff]
    %v102 = vld [vmem:[#allocation2 + $0x8] sm:$0xff]
    %v103 = vld [vmem:[#allocation2 + $0x10] sm:$0xff]
    %v104 = vld [vmem:[#allocation2 + $0x18] sm:$0xff]
    %v105 = vld [vmem:[#allocation2 + $0x20] sm:$0xff]
    %v106 = vld [vmem:[#allocation2 + $0x28] sm:$0xff]
    %v107 = vld [vmem:[#allocation2 + $0x30] sm:$0xff]
    %v108 = vld [vmem:[#allocation2 + $0x38] sm:$0xff]
    %v109 = vld [vmem:[#allocation2 + $0x40] sm:$0xff]
    %v110 = vld [vmem:[#allocation2 + $0x48] sm:$0xff]
    %v111 = vld [vmem:[#allocation2 + $0x50] sm:$0xff]
    %v112 = vld [vmem:[#allocation2 + $0x58] sm:$0xff]
    %v113 = vld [vmem:[#allocation2 + $0x60] sm:$0xff]
    %v114 = vld [vmem:[#allocation2 + $0x68] sm:$0xff]
    %v115 = vld [vmem:[#allocation2 + $0x70] sm:$0xff]
    %v116 = vld [vmem:[#allocation2 + $0x78] sm:$0xff]
    %v117 = vld [vmem:[%s2] sm:$0xff]
    %v118 = vld [vmem:[%s2 + $0x8] sm:$0xff]
    %v119 = vld [vmem:[%s2 + $0x10] sm:$0xff]
    %v120 = vld [vmem:[%s2 + $0x18] sm:$0xff]
    %v121 = vld [vmem:[%s1] sm:$0x3]
    %v123 = vlaneseq
    %v124 = vshrl.u32 %v123, 7
    %v125 = vsub.s32 0, %v124
    %v126 = vrot.slane %v121, %v125
    %v127 = vlaneseq
    %v128 = vshrl.u32 %v127, 7
    %v129 = vsub.s32 1, %v128
    %v130 = vrot.slane %v121, %v129
    %vm133 = vcmask 130048
    %v135 = vsel %vm133, %v101, 0
    %v138 = vsel %vm133, %v102, 0
    %v141 = vsel %vm133, %v103, 0
    %v144 = vsel %vm133, %v104, 0
    %v147 = vsel %vm133, %v105, 0
    %v150 = vsel %vm133, %v106, 0
    %v153 = vsel %vm133, %v107, 0
    %v156 = vsel %vm133, %v108, 0
    %v159 = vsel %vm133, %v109, 0
    %v162 = vsel %vm133, %v110, 0
    %v165 = vsel %vm133, %v111, 0
    %v168 = vsel %vm133, %v112, 0
    %v171 = vsel %vm133, %v113, 0
    %v174 = vsel %vm133, %v114, 0
    %v177 = vsel %vm133, %v115, 0
    %v180 = vsel %vm133, %v116, 0
    %182 = vmatprep.subr.mxu0 %v118
    %183 = vmatpush1.msra.mxu0 %v117
    %184 = vmatprep.subr.mxu0 %v120
    %185 = vmatpush1.msra.mxu0 %v119
    %186 = vmatprep.subr.mxu0 0.0
    %187 = vmatpush1.msra.mxu0 0.0
    %188 = vmatprep.subr.mxu0 0.0
    %189 = vmatpush1.msra.mxu0 0.0
    %190 = vmatprep.subr.mxu0 0.0
    %191 = vmatpush1.msra.mxu0 0.0
    %192 = vmatprep.subr.mxu0 0.0
    %193 = vmatpush1.msra.mxu0 0.0
    %194 = vmatprep.subr.mxu0 0.0
    %195 = vmatpush1.msra.mxu0 0.0
    %196 = vmatprep.subr.mxu0 0.0
    %197 = vmatpush1.msra.mxu0 0.0
    %198 = vmatprep.subr.mxu0 0.0
    %199 = vmatpush1.msra.mxu0 0.0
    %200 = vmatprep.subr.mxu0 0.0
    %201 = vmatpush1.msra.mxu0 0.0
    %202 = vmatprep.subr.mxu0 0.0
    %203 = vmatpush1.msra.mxu0 0.0
    %204 = vmatprep.subr.mxu0 0.0
    %205 = vmatpush1.msra.mxu0 0.0
    %206 = vmatprep.subr.mxu0 0.0
    %207 = vmatpush1.msra.mxu0 0.0
    %208 = vmatprep.subr.mxu0 0.0
    %209 = vmatpush1.msra.mxu0 0.0
    %210 = vmatprep.subr.mxu0 0.0
    %211 = vmatpush1.msra.mxu0 0.0
    %212 = vmatprep.subr.mxu0 0.0
    %213 = vmatpush1.msra.mxu0 0.0
    %214 = vmatprep.subr.mxu0 0.0
    %215 = vmatpush1.msra.mxu0 0.0
    %216 = vmatprep.subr.mxu0 0.0
    %217 = vmatpush1.msra.mxu0 0.0
    %218 = vmatprep.subr.mxu0 0.0
    %219 = vmatpush1.msra.mxu0 0.0
    %220 = vmatprep.subr.mxu0 0.0
    %221 = vmatpush1.msra.mxu0 0.0
    %222 = vmatprep.subr.mxu0 0.0
    %223 = vmatpush1.msra.mxu0 0.0
    %224 = vmatprep.subr.mxu0 0.0
    %225 = vmatpush1.msra.mxu0 0.0
    %226 = vmatprep.subr.mxu0 0.0
    %227 = vmatpush1.msra.mxu0 0.0
    %228 = vmatprep.subr.mxu0 0.0
    %229 = vmatpush1.msra.mxu0 0.0
    %230 = vmatprep.subr.mxu0 0.0
    %231 = vmatpush1.msra.mxu0 0.0
    %232 = vmatprep.subr.mxu0 0.0
    %233 = vmatpush1.msra.mxu0 0.0
    %234 = vmatprep.subr.mxu0 0.0
    %235 = vmatpush1.msra.mxu0 0.0
    %236 = vmatprep.subr.mxu0 0.0
    %237 = vmatpush1.msra.mxu0 0.0
    %238 = vmatprep.subr.mxu0 0.0
    %239 = vmatpush1.msra.mxu0 0.0
    %240 = vmatprep.subr.mxu0 0.0
    %241 = vmatpush1.msra.mxu0 0.0
    %242 = vmatprep.subr.mxu0 0.0
    %243 = vmatpush1.msra.mxu0 0.0
    %244 = vmatprep.subr.mxu0 0.0
    %245 = vmatpush1.msra.mxu0 0.0
    %246 = vmatprep.mubr.f32.mxu0 0.0
    %247 = vmatmul.mubr.f32.gmra.mrb[0].mxu0 %v135
    %v248 = vpop.f32.mrb[0].mxu0
    %v249 = vadd.f32 %v126, %v248
    %v250 = vpop.f32.mrb[0].mxu0
    %v251 = vadd.f32 %v130, %v250
    %252 = vmatprep.mubr.f32.mxu0 0.0
    %253 = vmatmul.mubr.f32.gmra.mrb[0].mxu0 %v138
    %v254 = vpop.f32.mrb[0].mxu0
    %v255 = vadd.f32 %v126, %v254
    %v256 = vpop.f32.mrb[0].mxu0
    %v257 = vadd.f32 %v130, %v256
    %258 = vmatprep.mubr.f32.mxu0 0.0
    %259 = vmatmul.mubr.f32.gmra.mrb[0].mxu0 %v141
    %v260 = vpop.f32.mrb[0].mxu0
    %v261 = vadd.f32 %v126, %v260
    %v262 = vpop.f32.mrb[0].mxu0
    %v263 = vadd.f32 %v130, %v262
    %264 = vmatprep.mubr.f32.mxu0 0.0
    %265 = vmatmul.mubr.f32.gmra.mrb[0].mxu0 %v144
    %v266 = vpop.f32.mrb[0].mxu0
    %v267 = vadd.f32 %v126, %v266
    %v268 = vpop.f32.mrb[0].mxu0
    %v269 = vadd.f32 %v130, %v268
    %270 = vmatprep.mubr.f32.mxu0 0.0
    %271 = vmatmul.mubr.f32.gmra.mrb[0].mxu0 %v147
    %v272 = vpop.f32.mrb[0].mxu0
    %v273 = vadd.f32 %v126, %v272
    %v274 = vpop.f32.mrb[0].mxu0
    %v275 = vadd.f32 %v130, %v274
    %276 = vmatprep.mubr.f32.mxu0 0.0
    %277 = vmatmul.mubr.f32.gmra.mrb[0].mxu0 %v150
    %v278 = vpop.f32.mrb[0].mxu0
    %v279 = vadd.f32 %v126, %v278
    %v280 = vpop.f32.mrb[0].mxu0
    %v281 = vadd.f32 %v130, %v280
    %282 = vmatprep.mubr.f32.mxu0 0.0
    %283 = vmatmul.mubr.f32.gmra.mrb[0].mxu0 %v153
    %v284 = vpop.f32.mrb[0].mxu0
    %v285 = vadd.f32 %v126, %v284
    %v286 = vpop.f32.mrb[0].mxu0
    %v287 = vadd.f32 %v130, %v286
    %288 = vmatprep.mubr.f32.mxu0 0.0
    %289 = vmatmul.mubr.f32.gmra.mrb[0].mxu0 %v156
    %v290 = vpop.f32.mrb[0].mxu0
    %v291 = vadd.f32 %v126, %v290
    %v292 = vpop.f32.mrb[0].mxu0
    %v293 = vadd.f32 %v130, %v292
    %294 = vmatprep.mubr.f32.mxu0 0.0
    %295 = vmatmul.mubr.f32.gmra.mrb[0].mxu0 %v159
    %v296 = vpop.f32.mrb[0].mxu0
    %v297 = vadd.f32 %v126, %v296
    %v298 = vpop.f32.mrb[0].mxu0
    %v299 = vadd.f32 %v130, %v298
    %300 = vmatprep.mubr.f32.mxu0 0.0
    %301 = vmatmul.mubr.f32.gmra.mrb[0].mxu0 %v162
    %v302 = vpop.f32.mrb[0].mxu0
    %v303 = vadd.f32 %v126, %v302
    %v304 = vpop.f32.mrb[0].mxu0
    %v305 = vadd.f32 %v130, %v304
    %306 = vmatprep.mubr.f32.mxu0 0.0
    %307 = vmatmul.mubr.f32.gmra.mrb[0].mxu0 %v165
    %v308 = vpop.f32.mrb[0].mxu0
    %v309 = vadd.f32 %v126, %v308
    %v310 = vpop.f32.mrb[0].mxu0
    %v311 = vadd.f32 %v130, %v310
    %312 = vmatprep.mubr.f32.mxu0 0.0
    %313 = vmatmul.mubr.f32.gmra.mrb[0].mxu0 %v168
    %v314 = vpop.f32.mrb[0].mxu0
    %v315 = vadd.f32 %v126, %v314
    %v316 = vpop.f32.mrb[0].mxu0
    %v317 = vadd.f32 %v130, %v316
    %318 = vmatprep.mubr.f32.mxu0 0.0
    %319 = vmatmul.mubr.f32.gmra.mrb[0].mxu0 %v171
    %v320 = vpop.f32.mrb[0].mxu0
    %v321 = vadd.f32 %v126, %v320
    %v322 = vpop.f32.mrb[0].mxu0
    %v323 = vadd.f32 %v130, %v322
    %324 = vmatprep.mubr.f32.mxu0 0.0
    %325 = vmatmul.mubr.f32.gmra.mrb[0].mxu0 %v174
    %v326 = vpop.f32.mrb[0].mxu0
    %v327 = vadd.f32 %v126, %v326
    %v328 = vpop.f32.mrb[0].mxu0
    %v329 = vadd.f32 %v130, %v328
    %330 = vmatprep.mubr.f32.mxu0 0.0
    %331 = vmatmul.mubr.f32.gmra.mrb[0].mxu0 %v177
    %v332 = vpop.f32.mrb[0].mxu0
    %v333 = vadd.f32 %v126, %v332
    %v334 = vpop.f32.mrb[0].mxu0
    %v335 = vadd.f32 %v130, %v334
    %336 = vmatprep.mubr.f32.mxu0 0.0
    %337 = vmatmul.mubr.f32.gmra.mrb[0].mxu0 %v180
    %v338 = vpop.f32.mrb[0].mxu0
    %v339 = vadd.f32 %v126, %v338
    %v340 = vpop.f32.mrb[0].mxu0
    %v341 = vadd.f32 %v130, %v340
    %342 = vdwg.mxu0
    %v343 = vld [vmem:[#allocation3] sm:$0xff]
    %v344 = vld [vmem:[#allocation3 + $0x8] sm:$0xff]
    %v345 = vld [vmem:[#allocation3 + $0x10] sm:$0xff]
    %v346 = vld [vmem:[#allocation3 + $0x18] sm:$0xff]
    %v347 = vld [vmem:[#allocation3 + $0x20] sm:$0xff]
    %v348 = vld [vmem:[#allocation3 + $0x28] sm:$0xff]
    %v349 = vld [vmem:[#allocation3 + $0x30] sm:$0xff]
    %v350 = vld [vmem:[#allocation3 + $0x38] sm:$0xff]
    %v351 = vld [vmem:[#allocation3 + $0x40] sm:$0xff]
    %v352 = vld [vmem:[#allocation3 + $0x48] sm:$0xff]
    %v353 = vld [vmem:[#allocation3 + $0x50] sm:$0xff]
    %v354 = vld [vmem:[#allocation3 + $0x58] sm:$0xff]
    %v355 = vld [vmem:[#allocation3 + $0x60] sm:$0xff]
    %v356 = vld [vmem:[#allocation3 + $0x68] sm:$0xff]
    %v357 = vld [vmem:[#allocation3 + $0x70] sm:$0xff]
    %v358 = vld [vmem:[#allocation3 + $0x78] sm:$0xff]
    %v359 = vmax.f32 %v249, %v251
    %360 = vmax.xlane.f32.xlu0 %v359
    %v361 = vpop.xlane.xlu0 %360
    %v362 = vmax.f32 %v255, %v257
    %363 = vmax.xlane.f32.xlu0 %v362
    %v364 = vpop.xlane.xlu0 %363
    %v365 = vmax.f32 %v261, %v263
    %366 = vmax.xlane.f32.xlu0 %v365
    %v367 = vpop.xlane.xlu0 %366
    %v368 = vmax.f32 %v267, %v269
    %369 = vmax.xlane.f32.xlu0 %v368
    %v370 = vpop.xlane.xlu0 %369
    %v371 = vmax.f32 %v273, %v275
    %372 = vmax.xlane.f32.xlu0 %v371
    %v373 = vpop.xlane.xlu0 %372
    %v374 = vmax.f32 %v279, %v281
    %375 = vmax.xlane.f32.xlu0 %v374
    %v376 = vpop.xlane.xlu0 %375
    %v377 = vmax.f32 %v285, %v287
    %378 = vmax.xlane.f32.xlu0 %v377
    %v379 = vpop.xlane.xlu0 %378
    %v380 = vmax.f32 %v291, %v293
    %381 = vmax.xlane.f32.xlu0 %v380
    %v382 = vpop.xlane.xlu0 %381
    %v383 = vmax.f32 %v297, %v299
    %384 = vmax.xlane.f32.xlu0 %v383
    %v385 = vpop.xlane.xlu0 %384
    %v386 = vmax.f32 %v303, %v305
    %387 = vmax.xlane.f32.xlu0 %v386
    %v388 = vpop.xlane.xlu0 %387
    %v389 = vmax.f32 %v309, %v311
    %390 = vmax.xlane.f32.xlu0 %v389
    %v391 = vpop.xlane.xlu0 %390
    %v392 = vmax.f32 %v315, %v317
    %393 = vmax.xlane.f32.xlu0 %v392
    %v394 = vpop.xlane.xlu0 %393
    %v395 = vmax.f32 %v321, %v323
    %396 = vmax.xlane.f32.xlu0 %v395
    %v397 = vpop.xlane.xlu0 %396
    %v398 = vmax.f32 %v327, %v329
    %399 = vmax.xlane.f32.xlu0 %v398
    %v400 = vpop.xlane.xlu0 %399
    %v401 = vmax.f32 %v333, %v335
    %402 = vmax.xlane.f32.xlu0 %v401
    %v403 = vpop.xlane.xlu0 %402
    %v404 = vmax.f32 %v339, %v341
    %405 = vmax.xlane.f32.xlu0 %v404
    %v406 = vpop.xlane.xlu0 %405
    %v407 = vmax.f32 %v343, %v361
    %v408 = vmax.f32 %v344, %v364
    %v409 = vmax.f32 %v345, %v367
    %v410 = vmax.f32 %v346, %v370
    %v411 = vmax.f32 %v347, %v373
    %v412 = vmax.f32 %v348, %v376
    %v413 = vmax.f32 %v349, %v379
    %v414 = vmax.f32 %v350, %v382
    %v415 = vmax.f32 %v351, %v385
    %v416 = vmax.f32 %v352, %v388
    %v417 = vmax.f32 %v353, %v391
    %v418 = vmax.f32 %v354, %v394
    %v419 = vmax.f32 %v355, %v397
    %v420 = vmax.f32 %v356, %v400
    %v421 = vmax.f32 %v357, %v403
    %v422 = vmax.f32 %v358, %v406
    %v423 = vsub.f32 %v343, %v407
    %v424 = vsub.f32 %v344, %v408
    %v425 = vsub.f32 %v345, %v409
    %v426 = vsub.f32 %v346, %v410
    %v427 = vsub.f32 %v347, %v411
    %v428 = vsub.f32 %v348, %v412
    %v429 = vsub.f32 %v349, %v413
    %v430 = vsub.f32 %v350, %v414
    %v431 = vsub.f32 %v351, %v415
    %v432 = vsub.f32 %v352, %v416
    %v433 = vsub.f32 %v353, %v417
    %v434 = vsub.f32 %v354, %v418
    %v435 = vsub.f32 %v355, %v419
    %v436 = vsub.f32 %v356, %v420
    %v437 = vsub.f32 %v357, %v421
    %v438 = vsub.f32 %v358, %v422
    %v439 = vmul.f32 %v423, 1.442695
    %v440 = vpow.pop %v439
    %v441 = vmul.f32 %v424, 1.442695
    %v442 = vpow.pop %v441
    %v443 = vmul.f32 %v425, 1.442695
    %v444 = vpow.pop %v443
    %v445 = vmul.f32 %v426, 1.442695
    %v446 = vpow.pop %v445
    %v447 = vmul.f32 %v427, 1.442695
    %v448 = vpow.pop %v447
    %v449 = vmul.f32 %v428, 1.442695
    %v450 = vpow.pop %v449
    %v451 = vmul.f32 %v429, 1.442695
    %v452 = vpow.pop %v451
    %v453 = vmul.f32 %v430, 1.442695
    %v454 = vpow.pop %v453
    %v455 = vmul.f32 %v431, 1.442695
    %v456 = vpow.pop %v455
    %v457 = vmul.f32 %v432, 1.442695
    %v458 = vpow.pop %v457
    %v459 = vmul.f32 %v433, 1.442695
    %v460 = vpow.pop %v459
    %v461 = vmul.f32 %v434, 1.442695
    %v462 = vpow.pop %v461
    %v463 = vmul.f32 %v435, 1.442695
    %v464 = vpow.pop %v463
    %v465 = vmul.f32 %v436, 1.442695
    %v466 = vpow.pop %v465
    %v467 = vmul.f32 %v437, 1.442695
    %v468 = vpow.pop %v467
    %v469 = vmul.f32 %v438, 1.442695
    %v470 = vpow.pop %v469
    %v471 = vld [vmem:[#allocation4] sm:$0xff]
    %v472 = vld [vmem:[#allocation4 + $0x8] sm:$0xff]
    %v473 = vld [vmem:[#allocation4 + $0x10] sm:$0xff]
    %v474 = vld [vmem:[#allocation4 + $0x18] sm:$0xff]
    %v475 = vld [vmem:[#allocation4 + $0x20] sm:$0xff]
    %v476 = vld [vmem:[#allocation4 + $0x28] sm:$0xff]
    %v477 = vld [vmem:[#allocation4 + $0x30] sm:$0xff]
    %v478 = vld [vmem:[#allocation4 + $0x38] sm:$0xff]
    %v479 = vld [vmem:[#allocation4 + $0x40] sm:$0xff]
    %v480 = vld [vmem:[#allocation4 + $0x48] sm:$0xff]
    %v481 = vld [vmem:[#allocation4 + $0x50] sm:$0xff]
    %v482 = vld [vmem:[#allocation4 + $0x58] sm:$0xff]
    %v483 = vld [vmem:[#allocation4 + $0x60] sm:$0xff]
    %v484 = vld [vmem:[#allocation4 + $0x68] sm:$0xff]
    %v485 = vld [vmem:[#allocation4 + $0x70] sm:$0xff]
    %v486 = vld [vmem:[#allocation4 + $0x78] sm:$0xff]
    %v487 = vmul.f32 %v440, %v471
    %v488 = vmul.f32 %v442, %v472
    %v489 = vmul.f32 %v444, %v473
    %v490 = vmul.f32 %v446, %v474
    %v491 = vmul.f32 %v448, %v475
    %v492 = vmul.f32 %v450, %v476
    %v493 = vmul.f32 %v452, %v477
    %v494 = vmul.f32 %v454, %v478
    %v495 = vmul.f32 %v456, %v479
    %v496 = vmul.f32 %v458, %v480
    %v497 = vmul.f32 %v460, %v481
    %v498 = vmul.f32 %v462, %v482
    %v499 = vmul.f32 %v464, %v483
    %v500 = vmul.f32 %v466, %v484
    %v501 = vmul.f32 %v468, %v485
    %v502 = vmul.f32 %v470, %v486
    %504 = vset.pattern.permute.xlu0 0
    %505 = vperm.xlu0 %504, %v407
    %v506 = vpop.permute.xlu0 %505
    %509 = vset.pattern.permute.xlu0 0
    %510 = vperm.xlu0 %509, %v408
    %v511 = vpop.permute.xlu0 %510
    %514 = vset.pattern.permute.xlu0 0
    %515 = vperm.xlu0 %514, %v409
    %v516 = vpop.permute.xlu0 %515
    %519 = vset.pattern.permute.xlu0 0
    %520 = vperm.xlu0 %519, %v410
    %v521 = vpop.permute.xlu0 %520
    %524 = vset.pattern.permute.xlu0 0
    %525 = vperm.xlu0 %524, %v411
    %v526 = vpop.permute.xlu0 %525
    %529 = vset.pattern.permute.xlu0 0
    %530 = vperm.xlu0 %529, %v412
    %v531 = vpop.permute.xlu0 %530
    %534 = vset.pattern.permute.xlu0 0
    %535 = vperm.xlu0 %534, %v413
    %v536 = vpop.permute.xlu0 %535
    %539 = vset.pattern.permute.xlu0 0
    %540 = vperm.xlu0 %539, %v414
    %v541 = vpop.permute.xlu0 %540
    %544 = vset.pattern.permute.xlu0 0
    %545 = vperm.xlu0 %544, %v415
    %v546 = vpop.permute.xlu0 %545
    %549 = vset.pattern.permute.xlu0 0
    %550 = vperm.xlu0 %549, %v416
    %v551 = vpop.permute.xlu0 %550
    %554 = vset.pattern.permute.xlu0 0
    %555 = vperm.xlu0 %554, %v417
    %v556 = vpop.permute.xlu0 %555
    %559 = vset.pattern.permute.xlu0 0
    %560 = vperm.xlu0 %559, %v418
    %v561 = vpop.permute.xlu0 %560
    %564 = vset.pattern.permute.xlu0 0
    %565 = vperm.xlu0 %564, %v419
    %v566 = vpop.permute.xlu0 %565
    %569 = vset.pattern.permute.xlu0 0
    %570 = vperm.xlu0 %569, %v420
    %v571 = vpop.permute.xlu0 %570
    %574 = vset.pattern.permute.xlu0 0
    %575 = vperm.xlu0 %574, %v421
    %v576 = vpop.permute.xlu0 %575
    %579 = vset.pattern.permute.xlu0 0
    %580 = vperm.xlu0 %579, %v422
    %v581 = vpop.permute.xlu0 %580
    %v583 = vsub.f32 %v249, %v506
    %v584 = vsub.f32 %v251, %v506
    %v585 = vsub.f32 %v255, %v511
    %v586 = vsub.f32 %v257, %v511
    %v587 = vsub.f32 %v261, %v516
    %v588 = vsub.f32 %v263, %v516
    %v589 = vsub.f32 %v267, %v521
    %v590 = vsub.f32 %v269, %v521
    %v591 = vsub.f32 %v273, %v526
    %v592 = vsub.f32 %v275, %v526
    %v593 = vsub.f32 %v279, %v531
    %v594 = vsub.f32 %v281, %v531
    %v595 = vsub.f32 %v285, %v536
    %v596 = vsub.f32 %v287, %v536
    %v597 = vsub.f32 %v291, %v541
    %v598 = vsub.f32 %v293, %v541
    %v599 = vsub.f32 %v297, %v546
    %v600 = vsub.f32 %v299, %v546
    %v601 = vsub.f32 %v303, %v551
    %v602 = vsub.f32 %v305, %v551
    %v603 = vsub.f32 %v309, %v556
    %v604 = vsub.f32 %v311, %v556
    %v605 = vsub.f32 %v315, %v561
    %v606 = vsub.f32 %v317, %v561
    %v607 = vsub.f32 %v321, %v566
    %v608 = vsub.f32 %v323, %v566
    %v609 = vsub.f32 %v327, %v571
    %v610 = vsub.f32 %v329, %v571
    %v611 = vsub.f32 %v333, %v576
    %v612 = vsub.f32 %v335, %v576
    %v613 = vsub.f32 %v339, %v581
    %v614 = vsub.f32 %v341, %v581
    %v615 = vmul.f32 %v583, 1.442695
    %v616 = vpow.pop %v615
    %v617 = vmul.f32 %v584, 1.442695
    %v618 = vpow.pop %v617
    %v619 = vmul.f32 %v585, 1.442695
    %v620 = vpow.pop %v619
    %v621 = vmul.f32 %v586, 1.442695
    %v622 = vpow.pop %v621
    %v623 = vmul.f32 %v587, 1.442695
    %v624 = vpow.pop %v623
    %v625 = vmul.f32 %v588, 1.442695
    %v626 = vpow.pop %v625
    %v627 = vmul.f32 %v589, 1.442695
    %v628 = vpow.pop %v627
    %v629 = vmul.f32 %v590, 1.442695
    %v630 = vpow.pop %v629
    %v631 = vmul.f32 %v591, 1.442695
    %v632 = vpow.pop %v631
    %v633 = vmul.f32 %v592, 1.442695
    %v634 = vpow.pop %v633
    %v635 = vmul.f32 %v593, 1.442695
    %v636 = vpow.pop %v635
    %v637 = vmul.f32 %v594, 1.442695
    %v638 = vpow.pop %v637
    %v639 = vmul.f32 %v595, 1.442695
    %v640 = vpow.pop %v639
    %v641 = vmul.f32 %v596, 1.442695
    %v642 = vpow.pop %v641
    %v643 = vmul.f32 %v597, 1.442695
    %v644 = vpow.pop %v643
    %v645 = vmul.f32 %v598, 1.442695
    %v646 = vpow.pop %v645
    %v647 = vmul.f32 %v599, 1.442695
    %v648 = vpow.pop %v647
    %v649 = vmul.f32 %v600, 1.442695
    %v650 = vpow.pop %v649
    %v651 = vmul.f32 %v601, 1.442695
    %v652 = vpow.pop %v651
    %v653 = vmul.f32 %v602, 1.442695
    %v654 = vpow.pop %v653
    %v655 = vmul.f32 %v603, 1.442695
    %v656 = vpow.pop %v655
    %v657 = vmul.f32 %v604, 1.442695
    %v658 = vpow.pop %v657
    %v659 = vmul.f32 %v605, 1.442695
    %v660 = vpow.pop %v659
    %v661 = vmul.f32 %v606, 1.442695
    %v662 = vpow.pop %v661
    %v663 = vmul.f32 %v607, 1.442695
    %v664 = vpow.pop %v663
    %v665 = vmul.f32 %v608, 1.442695
    %v666 = vpow.pop %v665
    %v667 = vmul.f32 %v609, 1.442695
    %v668 = vpow.pop %v667
    %v669 = vmul.f32 %v610, 1.442695
    %v670 = vpow.pop %v669
    %v671 = vmul.f32 %v611, 1.442695
    %v672 = vpow.pop %v671
    %v673 = vmul.f32 %v612, 1.442695
    %v674 = vpow.pop %v673
    %v675 = vmul.f32 %v613, 1.442695
    %v676 = vpow.pop %v675
    %v677 = vmul.f32 %v614, 1.442695
    %v678 = vpow.pop %v677
    %v679 = vadd.f32 %v616, %v618
    %680 = vadd.xlane.f32.xlu0 %v679
    %v681 = vpop.xlane.xlu0 %680
    %v682 = vadd.f32 %v620, %v622
    %683 = vadd.xlane.f32.xlu0 %v682
    %v684 = vpop.xlane.xlu0 %683
    %v685 = vadd.f32 %v624, %v626
    %686 = vadd.xlane.f32.xlu0 %v685
    %v687 = vpop.xlane.xlu0 %686
    %v688 = vadd.f32 %v628, %v630
    %689 = vadd.xlane.f32.xlu0 %v688
    %v690 = vpop.xlane.xlu0 %689
    %v691 = vadd.f32 %v632, %v634
    %692 = vadd.xlane.f32.xlu0 %v691
    %v693 = vpop.xlane.xlu0 %692
    %v694 = vadd.f32 %v636, %v638
    %695 = vadd.xlane.f32.xlu0 %v694
    %v696 = vpop.xlane.xlu0 %695
    %v697 = vadd.f32 %v640, %v642
    %698 = vadd.xlane.f32.xlu0 %v697
    %v699 = vpop.xlane.xlu0 %698
    %v700 = vadd.f32 %v644, %v646
    %701 = vadd.xlane.f32.xlu0 %v700
    %v702 = vpop.xlane.xlu0 %701
    %v703 = vadd.f32 %v648, %v650
    %704 = vadd.xlane.f32.xlu0 %v703
    %v705 = vpop.xlane.xlu0 %704
    %v706 = vadd.f32 %v652, %v654
    %707 = vadd.xlane.f32.xlu0 %v706
    %v708 = vpop.xlane.xlu0 %707
    %v709 = vadd.f32 %v656, %v658
    %710 = vadd.xlane.f32.xlu0 %v709
    %v711 = vpop.xlane.xlu0 %710
    %v712 = vadd.f32 %v660, %v662
    %713 = vadd.xlane.f32.xlu0 %v712
    %v714 = vpop.xlane.xlu0 %713
    %v715 = vadd.f32 %v664, %v666
    %716 = vadd.xlane.f32.xlu0 %v715
    %v717 = vpop.xlane.xlu0 %716
    %v718 = vadd.f32 %v668, %v670
    %719 = vadd.xlane.f32.xlu0 %v718
    %v720 = vpop.xlane.xlu0 %719
    %v721 = vadd.f32 %v672, %v674
    %722 = vadd.xlane.f32.xlu0 %v721
    %v723 = vpop.xlane.xlu0 %722
    %v724 = vadd.f32 %v676, %v678
    %725 = vadd.xlane.f32.xlu0 %v724
    %v726 = vpop.xlane.xlu0 %725
    %v727 = vadd.f32 %v487, %v681
    %v728 = vadd.f32 %v488, %v684
    %v729 = vadd.f32 %v489, %v687
    %v730 = vadd.f32 %v490, %v690
    %v731 = vadd.f32 %v491, %v693
    %v732 = vadd.f32 %v492, %v696
    %v733 = vadd.f32 %v493, %v699
    %v734 = vadd.f32 %v494, %v702
    %v735 = vadd.f32 %v495, %v705
    %v736 = vadd.f32 %v496, %v708
    %v737 = vadd.f32 %v497, %v711
    %v738 = vadd.f32 %v498, %v714
    %v739 = vadd.f32 %v499, %v717
    %v740 = vadd.f32 %v500, %v720
    %v741 = vadd.f32 %v501, %v723
    %v742 = vadd.f32 %v502, %v726
    %vm743 = vcmask 7168
    %744 = vst.msk [vmem:[#allocation4] sm:$0xff] %vm743, %v727
    %745 = vst.msk [vmem:[#allocation4 + $0x8] sm:$0xff] %vm743, %v728
    %746 = vst.msk [vmem:[#allocation4 + $0x10] sm:$0xff] %vm743, %v729
    %747 = vst.msk [vmem:[#allocation4 + $0x18] sm:$0xff] %vm743, %v730
    %748 = vst.msk [vmem:[#allocation4 + $0x20] sm:$0xff] %vm743, %v731
    %749 = vst.msk [vmem:[#allocation4 + $0x28] sm:$0xff] %vm743, %v732
    %750 = vst.msk [vmem:[#allocation4 + $0x30] sm:$0xff] %vm743, %v733
    %751 = vst.msk [vmem:[#allocation4 + $0x38] sm:$0xff] %vm743, %v734
    %752 = vst.msk [vmem:[#allocation4 + $0x40] sm:$0xff] %vm743, %v735
    %753 = vst.msk [vmem:[#allocation4 + $0x48] sm:$0xff] %vm743, %v736
    %754 = vst.msk [vmem:[#allocation4 + $0x50] sm:$0xff] %vm743, %v737
    %755 = vst.msk [vmem:[#allocation4 + $0x58] sm:$0xff] %vm743, %v738
    %756 = vst.msk [vmem:[#allocation4 + $0x60] sm:$0xff] %vm743, %v739
    %757 = vst.msk [vmem:[#allocation4 + $0x68] sm:$0xff] %vm743, %v740
    %758 = vst.msk [vmem:[#allocation4 + $0x70] sm:$0xff] %vm743, %v741
    %759 = vst.msk [vmem:[#allocation4 + $0x78] sm:$0xff] %vm743, %v742
    %760 = vst.msk [vmem:[#allocation3] sm:$0xff] %vm743, %v407
    %761 = vst.msk [vmem:[#allocation3 + $0x8] sm:$0xff] %vm743, %v408
    %762 = vst.msk [vmem:[#allocation3 + $0x10] sm:$0xff] %vm743, %v409
    %763 = vst.msk [vmem:[#allocation3 + $0x18] sm:$0xff] %vm743, %v410
    %764 = vst.msk [vmem:[#allocation3 + $0x20] sm:$0xff] %vm743, %v411
    %765 = vst.msk [vmem:[#allocation3 + $0x28] sm:$0xff] %vm743, %v412
    %766 = vst.msk [vmem:[#allocation3 + $0x30] sm:$0xff] %vm743, %v413
    %767 = vst.msk [vmem:[#allocation3 + $0x38] sm:$0xff] %vm743, %v414
    %768 = vst.msk [vmem:[#allocation3 + $0x40] sm:$0xff] %vm743, %v415
    %769 = vst.msk [vmem:[#allocation3 + $0x48] sm:$0xff] %vm743, %v416
    %770 = vst.msk [vmem:[#allocation3 + $0x50] sm:$0xff] %vm743, %v417
    %771 = vst.msk [vmem:[#allocation3 + $0x58] sm:$0xff] %vm743, %v418
    %772 = vst.msk [vmem:[#allocation3 + $0x60] sm:$0xff] %vm743, %v419
    %773 = vst.msk [vmem:[#allocation3 + $0x68] sm:$0xff] %vm743, %v420
    %774 = vst.msk [vmem:[#allocation3 + $0x70] sm:$0xff] %vm743, %v421
    %775 = vst.msk [vmem:[#allocation3 + $0x78] sm:$0xff] %vm743, %v422
    // Predicated region
    $region18: #{tpu_custom_call.1} parent=1 // pred_check
      %p776 = pneg %p15
    $region19: #{tpu_custom_call.1} parent=1 // pred_check_branch
      %778 = sbr.rel (%p776) target = $region21
    $region20: #{tpu_custom_call.1} parent=1 // pred_region
      %v779 = vld [vmem:[%s0] sm:$0xff]
      %v780 = vld [vmem:[%s0 + $0x8] sm:$0xff]
      %v781 = vld [vmem:[%s0 + $0x10] sm:$0xff]
      %v782 = vld [vmem:[%s0 + $0x18] sm:$0xff]
      %v783 = vld [vmem:[%s0 + $0x20] sm:$0xff]
      %v784 = vld [vmem:[%s0 + $0x28] sm:$0xff]
      %v785 = vld [vmem:[%s0 + $0x30] sm:$0xff]
      %v786 = vld [vmem:[%s0 + $0x38] sm:$0xff]
      %v787 = vld [vmem:[%s0 + $0x40] sm:$0xff]
      %v788 = vld [vmem:[%s0 + $0x48] sm:$0xff]
      %v789 = vld [vmem:[%s0 + $0x50] sm:$0xff]
      %v790 = vld [vmem:[%s0 + $0x58] sm:$0xff]
      %v791 = vld [vmem:[%s0 + $0x60] sm:$0xff]
      %v792 = vld [vmem:[%s0 + $0x68] sm:$0xff]
      %v793 = vld [vmem:[%s0 + $0x70] sm:$0xff]
      %v794 = vld [vmem:[%s0 + $0x78] sm:$0xff]
      %v795 = vmul.f32 %v779, %v779
      %v796 = vmul.f32 %v780, %v780
      %v797 = vmul.f32 %v781, %v781
      %v798 = vmul.f32 %v782, %v782
      %v799 = vmul.f32 %v783, %v783
      %v800 = vmul.f32 %v784, %v784
      %v801 = vmul.f32 %v785, %v785
      %v802 = vmul.f32 %v786, %v786
      %v803 = vmul.f32 %v787, %v787
      %v804 = vmul.f32 %v788, %v788
      %v805 = vmul.f32 %v789, %v789
      %v806 = vmul.f32 %v790, %v790
      %v807 = vmul.f32 %v791, %v791
      %v808 = vmul.f32 %v792, %v792
      %v809 = vmul.f32 %v793, %v793
      %v810 = vmul.f32 %v794, %v794
      %v811 = vsel %vm133, %v795, 0.0
      %812 = vadd.xlane.f32.xlu0 %v811
      %v813 = vpop.xlane.xlu0 %812
      %v814 = vsel %vm133, %v796, 0.0
      %815 = vadd.xlane.f32.xlu0 %v814
      %v816 = vpop.xlane.xlu0 %815
      %v817 = vsel %vm133, %v797, 0.0
      %818 = vadd.xlane.f32.xlu0 %v817
      %v819 = vpop.xlane.xlu0 %818
      %v820 = vsel %vm133, %v798, 0.0
      %821 = vadd.xlane.f32.xlu0 %v820
      %v822 = vpop.xlane.xlu0 %821
      %v823 = vsel %vm133, %v799, 0.0
      %824 = vadd.xlane.f32.xlu0 %v823
      %v825 = vpop.xlane.xlu0 %824
      %v826 = vsel %vm133, %v800, 0.0
      %827 = vadd.xlane.f32.xlu0 %v826
      %v828 = vpop.xlane.xlu0 %827
      %v829 = vsel %vm133, %v801, 0.0
      %830 = vadd.xlane.f32.xlu0 %v829
      %v831 = vpop.xlane.xlu0 %830
      %v832 = vsel %vm133, %v802, 0.0
      %833 = vadd.xlane.f32.xlu0 %v832
      %v834 = vpop.xlane.xlu0 %833
      %v835 = vsel %vm133, %v803, 0.0
      %836 = vadd.xlane.f32.xlu0 %v835
      %v837 = vpop.xlane.xlu0 %836
      %v838 = vsel %vm133, %v804, 0.0
      %839 = vadd.xlane.f32.xlu0 %v838
      %v840 = vpop.xlane.xlu0 %839
      %v841 = vsel %vm133, %v805, 0.0
      %842 = vadd.xlane.f32.xlu0 %v841
      %v843 = vpop.xlane.xlu0 %842
      %v844 = vsel %vm133, %v806, 0.0
      %845 = vadd.xlane.f32.xlu0 %v844
      %v846 = vpop.xlane.xlu0 %845
      %v847 = vsel %vm133, %v807, 0.0
      %848 = vadd.xlane.f32.xlu0 %v847
      %v849 = vpop.xlane.xlu0 %848
      %v850 = vsel %vm133, %v808, 0.0
      %851 = vadd.xlane.f32.xlu0 %v850
      %v852 = vpop.xlane.xlu0 %851
      %v853 = vsel %vm133, %v809, 0.0
      %854 = vadd.xlane.f32.xlu0 %v853
      %v855 = vpop.xlane.xlu0 %854
      %v856 = vsel %vm133, %v810, 0.0
      %857 = vadd.xlane.f32.xlu0 %v856
      %v858 = vpop.xlane.xlu0 %857
      %v859 = vld [vmem:[#allocation3] sm:$0xff]
      %v860 = vld [vmem:[#allocation3 + $0x8] sm:$0xff]
      %v861 = vld [vmem:[#allocation3 + $0x10] sm:$0xff]
      %v862 = vld [vmem:[#allocation3 + $0x18] sm:$0xff]
      %v863 = vld [vmem:[#allocation3 + $0x20] sm:$0xff]
      %v864 = vld [vmem:[#allocation3 + $0x28] sm:$0xff]
      %v865 = vld [vmem:[#allocation3 + $0x30] sm:$0xff]
      %v866 = vld [vmem:[#allocation3 + $0x38] sm:$0xff]
      %v867 = vld [vmem:[#allocation3 + $0x40] sm:$0xff]
      %v868 = vld [vmem:[#allocation3 + $0x48] sm:$0xff]
      %v869 = vld [vmem:[#allocation3 + $0x50] sm:$0xff]
      %v870 = vld [vmem:[#allocation3 + $0x58] sm:$0xff]
      %v871 = vld [vmem:[#allocation3 + $0x60] sm:$0xff]
      %v872 = vld [vmem:[#allocation3 + $0x68] sm:$0xff]
      %v873 = vld [vmem:[#allocation3 + $0x70] sm:$0xff]
      %v874 = vld [vmem:[#allocation3 + $0x78] sm:$0xff]
      %v875 = vld [vmem:[#allocation4] sm:$0xff]
      %v876 = vld [vmem:[#allocation4 + $0x8] sm:$0xff]
      %v877 = vld [vmem:[#allocation4 + $0x10] sm:$0xff]
      %v878 = vld [vmem:[#allocation4 + $0x18] sm:$0xff]
      %v879 = vld [vmem:[#allocation4 + $0x20] sm:$0xff]
      %v880 = vld [vmem:[#allocation4 + $0x28] sm:$0xff]
      %v881 = vld [vmem:[#allocation4 + $0x30] sm:$0xff]
      %v882 = vld [vmem:[#allocation4 + $0x38] sm:$0xff]
      %v883 = vld [vmem:[#allocation4 + $0x40] sm:$0xff]
      %v884 = vld [vmem:[#allocation4 + $0x48] sm:$0xff]
      %v885 = vld [vmem:[#allocation4 + $0x50] sm:$0xff]
      %v886 = vld [vmem:[#allocation4 + $0x58] sm:$0xff]
      %v887 = vld [vmem:[#allocation4 + $0x60] sm:$0xff]
      %v888 = vld [vmem:[#allocation4 + $0x68] sm:$0xff]
      %v889 = vld [vmem:[#allocation4 + $0x70] sm:$0xff]
      %v890 = vld [vmem:[#allocation4 + $0x78] sm:$0xff]
      %v891 = vlog2.pop %v875
      %v892 = vmul.f32 %v891, 0.6931472
      %v893 = vlog2.pop %v876
      %v894 = vmul.f32 %v893, 0.6931472
      %v895 = vlog2.pop %v877
      %v896 = vmul.f32 %v895, 0.6931472
      %v897 = vlog2.pop %v878
      %v898 = vmul.f32 %v897, 0.6931472
      %v899 = vlog2.pop %v879
      %v900 = vmul.f32 %v899, 0.6931472
      %v901 = vlog2.pop %v880
      %v902 = vmul.f32 %v901, 0.6931472
      %v903 = vlog2.pop %v881
      %v904 = vmul.f32 %v903, 0.6931472
      %v905 = vlog2.pop %v882
      %v906 = vmul.f32 %v905, 0.6931472
      %v907 = vlog2.pop %v883
      %v908 = vmul.f32 %v907, 0.6931472
      %v909 = vlog2.pop %v884
      %v910 = vmul.f32 %v909, 0.6931472
      %v911 = vlog2.pop %v885
      %v912 = vmul.f32 %v911, 0.6931472
      %v913 = vlog2.pop %v886
      %v914 = vmul.f32 %v913, 0.6931472
      %v915 = vlog2.pop %v887
      %v916 = vmul.f32 %v915, 0.6931472
      %v917 = vlog2.pop %v888
      %v918 = vmul.f32 %v917, 0.6931472
      %v919 = vlog2.pop %v889
      %v920 = vmul.f32 %v919, 0.6931472
      %v921 = vlog2.pop %v890
      %v922 = vmul.f32 %v921, 0.6931472
      %v923 = vadd.f32 %v859, %v892
      %v924 = vadd.f32 %v860, %v894
      %v925 = vadd.f32 %v861, %v896
      %v926 = vadd.f32 %v862, %v898
      %v927 = vadd.f32 %v863, %v900
      %v928 = vadd.f32 %v864, %v902
      %v929 = vadd.f32 %v865, %v904
      %v930 = vadd.f32 %v866, %v906
      %v931 = vadd.f32 %v867, %v908
      %v932 = vadd.f32 %v868, %v910
      %v933 = vadd.f32 %v869, %v912
      %v934 = vadd.f32 %v870, %v914
      %v935 = vadd.f32 %v871, %v916
      %v936 = vadd.f32 %v872, %v918
      %v937 = vadd.f32 %v873, %v920
      %v938 = vadd.f32 %v874, %v922
      %v939 = vmul.f32 %v813, 2.0
      %v940 = vmul.f32 %v816, 2.0
      %v941 = vmul.f32 %v819, 2.0
      %v942 = vmul.f32 %v822, 2.0
      %v943 = vmul.f32 %v825, 2.0
      %v944 = vmul.f32 %v828, 2.0
      %v945 = vmul.f32 %v831, 2.0
      %v946 = vmul.f32 %v834, 2.0
      %v947 = vmul.f32 %v837, 2.0
      %v948 = vmul.f32 %v840, 2.0
      %v949 = vmul.f32 %v843, 2.0
      %v950 = vmul.f32 %v846, 2.0
      %v951 = vmul.f32 %v849, 2.0
      %v952 = vmul.f32 %v852, 2.0
      %v953 = vmul.f32 %v855, 2.0
      %v954 = vmul.f32 %v858, 2.0
      %v955 = vsub.f32 %v923, %v939
      %v956 = vsub.f32 %v924, %v940
      %v957 = vsub.f32 %v925, %v941
      %v958 = vsub.f32 %v926, %v942
      %v959 = vsub.f32 %v927, %v943
      %v960 = vsub.f32 %v928, %v944
      %v961 = vsub.f32 %v929, %v945
      %v962 = vsub.f32 %v930, %v946
      %v963 = vsub.f32 %v931, %v947
      %v964 = vsub.f32 %v932, %v948
      %v965 = vsub.f32 %v933, %v949
      %v966 = vsub.f32 %v934, %v950
      %v967 = vsub.f32 %v935, %v951
      %v968 = vsub.f32 %v936, %v952
      %v969 = vsub.f32 %v937, %v953
      %v970 = vsub.f32 %v938, %v954
      %v971 = vsub.f32 %v955, 9.157839
      %v972 = vsub.f32 %v956, 9.157839
      %v973 = vsub.f32 %v957, 9.157839
      %v974 = vsub.f32 %v958, 9.157839
      %v975 = vsub.f32 %v959, 9.157839
      %v976 = vsub.f32 %v960, 9.157839
      %v977 = vsub.f32 %v961, 9.157839
      %v978 = vsub.f32 %v962, 9.157839
      %v979 = vsub.f32 %v963, 9.157839
      %v980 = vsub.f32 %v964, 9.157839
      %v981 = vsub.f32 %v965, 9.157839
      %v982 = vsub.f32 %v966, 9.157839
      %v983 = vsub.f32 %v967, 9.157839
      %v984 = vsub.f32 %v968, 9.157839
      %v985 = vsub.f32 %v969, 9.157839
      %v986 = vsub.f32 %v970, 9.157839
      %987 = vxpose.xlu0.b32.start [1/16] %v971, 128
      %988 = vxpose.xlu0.b32.cont [2/16] %v972, 128
      %989 = vxpose.xlu0.b32.cont [3/16] %v973, 128
      %990 = vxpose.xlu0.b32.cont [4/16] %v974, 128
      %991 = vxpose.xlu0.b32.cont [5/16] %v975, 128
      %992 = vxpose.xlu0.b32.cont [6/16] %v976, 128
      %993 = vxpose.xlu0.b32.cont [7/16] %v977, 128
      %994 = vxpose.xlu0.b32.cont [8/16] %v978, 128
      %995 = vxpose.xlu0.b32.cont [9/16] %v979, 128
      %996 = vxpose.xlu0.b32.cont [10/16] %v980, 128
      %997 = vxpose.xlu0.b32.cont [11/16] %v981, 128
      %998 = vxpose.xlu0.b32.cont [12/16] %v982, 128
      %999 = vxpose.xlu0.b32.cont [13/16] %v983, 128
      %1000 = vxpose.xlu0.b32.cont [14/16] %v984, 128
      %1001 = vxpose.xlu0.b32.cont [15/16] %v985, 128
      %1002 = vxpose.xlu0.b32.end [16/16] %v986, 128
      %v1003 = vpop.trf.xlu0
      %v1004 = vpop.trf.xlu0
      %v1005 = vpop.trf.xlu0
      %v1006 = vpop.trf.xlu0
      %v1007 = vpop.trf.xlu0
      %v1008 = vpop.trf.xlu0
      %v1009 = vpop.trf.xlu0
      %v1010 = vpop.trf.xlu0
      %v1011 = vpop.trf.xlu0
      %v1012 = vpop.trf.xlu0
      %v1013 = vpop.trf.xlu0
      %v1014 = vpop.trf.xlu0
      %v1015 = vpop.trf.xlu0
      %v1016 = vpop.trf.xlu0
      %v1017 = vpop.trf.xlu0
      %v1018 = vpop.trf.xlu0
      %1019 = vst [vmem:[#allocation5] sm:$0x1] %v1003
    $region21: #{tpu_custom_call.1} parent=1 // pred_fallthru
      _
    // Predicated region
    $region22: #{tpu_custom_call.1} parent=1 // pred_check
      _
    $region23: #{tpu_custom_call.1} parent=1 // pred_check_branch
      %1021 = sbr.rel (0) target = $region25
    $region24: #{tpu_custom_call.1} parent=1 // pred_region
      %s1023 = ssub.s32 16, 16
      %1024 = vsyncadd [#allocation6], %s1023
      %s1026 = sshll.u32 [#allocation5], 4
      %s1027 = int_to_ptr.vmem [resolvable:$true] %s1026
      %1029 = dma.vmem_to_hbm [thread:$0]  %s1027, 16, %s3, [#allocation6]
    $region25: #{tpu_custom_call.1} parent=1 // pred_fallthru
      _
    // Predicated region
    $region26: #{tpu_custom_call.1} parent=1 // pred_check
      _
    $region27: #{tpu_custom_call.1} parent=1 // pred_check_branch
      %1031 = sbr.rel (0) target = $region29
    $region28: #{tpu_custom_call.1} parent=1 // pred_region
      %1032 = dma.done [#allocation6], 16
    $region29: #{tpu_custom_call.1} parent=1 // pred_fallthru
      _
    %1033 = vsyncpa [#allocation6], 1

</llo_original>
